<compile_context>
chip_gen: v5e
topology: v5e:2x2
jax: 0.10.0
libtpu: 0.0.40
codegen_flags: <defaults>
</compile_context>

<pallas_src>
import functools

import jax
import jax.numpy as jnp
import numpy as np
from jax import lax
from jax.experimental import pallas as pl
from jax.experimental.pallas import tpu as pltpu


def _round_up(v, m):
    return (v + m - 1) // m * m


# ----------------------------------------------------------------------------- kernel
def _crb_kernel(x_ref, scale_ref, fbias_ref, w1_ref, w2_ref, wr_ref, pp_ref,
                gsum_ref, gb_ref, out_ref, hp2_ref, *, cond_predict_scale, pad, T):
    f32 = jnp.float32
    b_blk, _, Cout = out_ref.shape
    Cin = x_ref.shape[2]
    K = w1_ref.shape[0]
    rows = b_blk * T

    pp = pp_ref[...].astype(f32)      # (8, Cout) packed: b1,g1,be1,b2,g2,be2,br,0
    gsum = gsum_ref[...]              # (Cout, G) one-hot scaled by 1/(Cg*T)
    gb = gb_ref[...]                  # (G, Cout) one-hot

    def mish(v):
        # v * tanh(softplus(v)) == v * q/(q+2) with q = (1+e)^2 - 1 = e*(2+e), e = exp(v).
        # exp argument clamped: for v >= 20, q/(q+2) == 1 in f32 so mish(v) == v.
        e = jnp.exp(jnp.minimum(v, 20.0))
        q = e * (2.0 + e)
        return v * q * pl.reciprocal(q + 2.0, approx=True)

    def conv3(src_ref, w_ref, bias):
        # k=3 "same" conv as K accumulated matmuls batched over the block:
        # LHS has M = b_blk*T rows, so the MXU systolic array is actually filled.
        cin = src_ref.shape[2]
        acc = None
        for k in range(K):
            lhs = src_ref[:, k:k + T, :].reshape(rows, cin)
            part = jnp.dot(lhs, w_ref[k], preferred_element_type=f32)
            acc = part if acc is None else acc + part
        return (acc + bias).reshape(b_blk, T, Cout)

    def gn_mish(h, gamma, beta):
        # Per-sample GroupNorm (biased var, eps=1e-5) folded to a per-channel affine.
        s = jnp.sum(h, axis=1)                                               # (b_blk, Cout)
        mean = jnp.dot(jnp.dot(s, gsum, preferred_element_type=f32), gb,
                       preferred_element_type=f32)                           # (b_blk, Cout)
        d = h - mean[:, None, :]
        vs = jnp.sum(d * d, axis=1)
        var = jnp.dot(jnp.dot(vs, gsum, preferred_element_type=f32), gb,
                      preferred_element_type=f32)
        a = gamma * lax.rsqrt(var + 1e-5)                                    # (b_blk, Cout)
        return mish(d * a[:, None, :] + beta)

    # ---- Conv1dBlock #1 ----
    h = gn_mish(conv3(x_ref, w1_ref, pp[0:1, :]), pp[1:2, :], pp[2:3, :])

    # ---- FiLM (cond encoder hoisted to the wrapper; scale/bias pre-split) ----
    if cond_predict_scale:
        h = scale_ref[...].astype(f32) * h + fbias_ref[...].astype(f32)
    else:
        h = h + fbias_ref[...].astype(f32)

    # ---- Conv1dBlock #2: padded activations live in a persistent VMEM scratch ----
    zrow = jnp.zeros((b_blk, pad, Cout), hp2_ref.dtype)
    hp2_ref[:, 0:pad, :] = zrow                       # leading pad rows
    hp2_ref[:, pad + T:2 * pad + T, :] = zrow         # trailing pad rows actually read
    hp2_ref[:, pad:pad + T, :] = h.astype(hp2_ref.dtype)
    h = gn_mish(conv3(hp2_ref, w2_ref, pp[3:4, :]), pp[4:5, :], pp[5:6, :])

    # ---- residual 1x1 conv (batched over the block) ----
    res = jnp.dot(x_ref[:, pad:pad + T, :].reshape(rows, Cin), wr_ref[...],
                  preferred_element_type=f32).reshape(b_blk, T, Cout)

    out_ref[...] = (h + res + pp[6:7, :]).astype(out_ref.dtype)


# ----------------------------------------------------------------------------- wrapper
def conditional_residual_block_1d(x, cond, params, *, n_groups, cond_predict_scale,
                                  mxu_dtype=jnp.bfloat16):
    B, Cin, T = x.shape
    Cout, _, K = params["w1"].shape
    pad = K // 2
    G = n_groups
    assert Cout % G == 0
    Cg = Cout // G
    f32 = jnp.float32

    def mish(v):
        return v * jnp.tanh(jax.nn.softplus(v))

    # --- hoisted cond encoder (one XLA matmul); FiLM scale/bias pre-split ---
    emb = jnp.matmul(mish(cond.astype(f32)), params["wc"].T.astype(f32),
                     precision=lax.Precision.HIGHEST) + params["bc"].astype(f32)
    if cond_predict_scale:
        scale = emb[:, :Cout].reshape(B, 1, Cout)
        fbias = emb[:, Cout:].reshape(B, 1, Cout)
    else:
        scale = jnp.ones((B, 1, Cout), f32)           # unused by the kernel in this mode
        fbias = emb.reshape(B, 1, Cout)

    # --- residual conv params (nn.Identity when Cin == Cout) ---
    wr = params.get("wr", None)
    br = params.get("br", None)
    if wr is None:
        wr = jnp.eye(Cout, Cin, dtype=f32)
        br = jnp.zeros((Cout,), f32)

    # --- layout plumbing: time-major, time padding rounded to a sublane multiple ---
    T_pad_r = _round_up(T + 2 * pad, 8)
    x_t = jnp.transpose(x, (0, 2, 1))                                      # (B, T, Cin)
    x_p = jnp.pad(x_t, ((0, 0), (pad, T_pad_r - T - pad), (0, 0))).astype(mxu_dtype)

    # --- weights as (K, Cin', Cout) stacks in the MXU dtype: W[k,i,o] = w[o,i,k] ---
    w1k = jnp.transpose(params["w1"], (2, 1, 0)).astype(mxu_dtype)         # (K, Cin, Cout)
    w2k = jnp.transpose(params["w2"], (2, 1, 0)).astype(mxu_dtype)         # (K, Cout, Cout)
    wrT = wr.T.astype(mxu_dtype)                                           # (Cin, Cout)

    # --- packed per-channel f32 params: b1,g1,be1,b2,g2,be2,br,(pad) ---
    pp = jnp.stack([params["b1"], params["g1"], params["be1"],
                    params["b2"], params["g2"], params["be2"],
                    br, jnp.zeros_like(br)], axis=0).astype(f32)           # (8, Cout)

    # --- skinny group one-hot matrices; 1/(Cg*T) folded into gsum ---
    gidx = jnp.arange(Cout) // Cg
    gsum = (gidx[:, None] == jnp.arange(G)[None, :]).astype(f32) / float(Cg * T)  # (Cout, G)
    gb = (gidx[None, :] == jnp.arange(G)[:, None]).astype(f32)                    # (G, Cout)

    # --- batch blocking: target >=256 MXU rows, bounded by an explicit VMEM budget ---
    b_blk = max(1, min(B, -(-256 // T)))

    def vmem_bytes(bb):
        it_w = jnp.dtype(mxu_dtype).itemsize
        it_o = jnp.dtype(x.dtype).itemsize
        weights = (K * Cin * Cout + K * Cout * Cout + Cin * Cout) * it_w   # single-buffered
        consts = (8 * Cout + 2 * G * Cout) * 4
        acts = 2 * bb * (T_pad_r * Cin * it_w + 2 * Cout * 4 + T * Cout * it_o)
        scratch = bb * T_pad_r * Cout * it_w
        live = 6 * bb * T * Cout * 4                                       # f32 intermediates
        return weights + consts + acts + scratch + live

    while b_blk > 1 and vmem_bytes(b_blk) > 36 * 1024 * 1024:              # keeps v7x (64 MiB/TC) safe
        b_blk = (b_blk + 1) // 2

    Bp = pl.cdiv(B, b_blk) * b_blk
    if Bp != B:                                        # zero-padded batch is GN/Mish safe
        bpad = ((0, Bp - B), (0, 0), (0, 0))
        x_p = jnp.pad(x_p, bpad)
        scale = jnp.pad(scale, bpad)
        fbias = jnp.pad(fbias, bpad)
    grid = (Bp // b_blk,)

    def batch_map(i):
        return (i, 0, 0)

    def const_spec(shape):
        # Constant-index operands: single-buffered to halve resident weight VMEM.
        idx = (lambda i: (0, 0, 0)) if len(shape) == 3 else (lambda i: (0, 0))
        try:
            return pl.BlockSpec(shape, idx, pipeline_mode=pl.Buffered(1))
        except Exception:
            return pl.BlockSpec(shape, idx)

    kernel = functools.partial(_crb_kernel, cond_predict_scale=cond_predict_scale,
                               pad=pad, T=T)

    out = pl.pallas_call(
        kernel,
        out_shape=jax.ShapeDtypeStruct((Bp, T, Cout), x.dtype),
        grid=grid,
        in_specs=[
            pl.BlockSpec((b_blk, T_pad_r, Cin), batch_map),   # x: time-major, padded, MXU dtype
            pl.BlockSpec((b_blk, 1, Cout), batch_map),        # FiLM scale
            pl.BlockSpec((b_blk, 1, Cout), batch_map),        # FiLM bias
            const_spec((K, Cin, Cout)),                       # conv1 weights
            const_spec((K, Cout, Cout)),                      # conv2 weights
            const_spec((Cin, Cout)),                          # residual 1x1 weights
            const_spec((8, Cout)),                            # packed per-channel params
            const_spec((Cout, G)),                            # group sum (scaled one-hot)
            const_spec((G, Cout)),                            # group broadcast one-hot
        ],
        out_specs=pl.BlockSpec((b_blk, T, Cout), batch_map),
        scratch_shapes=[pltpu.VMEM((b_blk, T_pad_r, Cout), mxu_dtype)],
        compiler_params=pltpu.CompilerParams(
            dimension_semantics=("parallel",),
            vmem_limit_bytes=48 * 1024 * 1024,
        ),
    )(x_p, scale, fbias, w1k, w2k, wrT, pp, gsum, gb)

    # back to PyTorch NCL layout
    return jnp.transpose(out[:B], (0, 2, 1))


# ----------------------------------------------------------------------------- reference (pure JAX)
def reference(x, cond, params, *, n_groups, cond_predict_scale):
    K = params["w1"].shape[2]
    pad = K // 2
    Cout = params["w1"].shape[0]

    def mish(v):
        return v * jnp.tanh(jax.nn.softplus(v))

    def conv1d(h, w, b):
        y = lax.conv_general_dilated(h, w, (1,), [(pad, pad)],
                                     dimension_numbers=("NCH", "OIH", "NCH"),
                                     precision=lax.Precision.HIGHEST)
        return y + b[None, :, None]

    def gnorm(h, g, be, eps=1e-5):
        B, C, T = h.shape
        hr = h.reshape(B, n_groups, (C // n_groups) * T)
        m = hr.mean(-1, keepdims=True)
        v = hr.var(-1, keepdims=True)
        hn = ((hr - m) / jnp.sqrt(v + eps)).reshape(B, C, T)
        return g[None, :, None] * hn + be[None, :, None]

    out = mish(gnorm(conv1d(x, params["w1"], params["b1"]), params["g1"], params["be1"]))
    emb = jnp.matmul(mish(cond), params["wc"].T,
                     precision=lax.Precision.HIGHEST) + params["bc"]
    if cond_predict_scale:
        out = emb[:, :Cout][:, :, None] * out + emb[:, Cout:][:, :, None]
    else:
        out = out + emb[:, :, None]
    out = mish(gnorm(conv1d(out, params["w2"], params["b2"]), params["g2"], params["be2"]))
    res = jnp.einsum("oc,bct->bot", params["wr"], x,
                     precision=lax.Precision.HIGHEST) + params["br"][None, :, None]
    return out + res


# ----------------------------------------------------------------------------- main
def _make_params(key, Cin, Cout, K, cond_dim, cond_predict_scale):
    cond_ch = Cout * 2 if cond_predict_scale else Cout
    ks = jax.random.split(key, 12)
    return dict(
        w1=0.3 * jax.random.normal(ks[0], (Cout, Cin, K), jnp.float32),
        b1=0.1 * jax.random.normal(ks[1], (Cout,), jnp.float32),
        g1=1.0 + 0.1 * jax.random.normal(ks[2], (Cout,), jnp.float32),
        be1=0.1 * jax.random.normal(ks[3], (Cout,), jnp.float32),
        wc=0.3 * jax.random.normal(ks[4], (cond_ch, cond_dim), jnp.float32),
        bc=0.1 * jax.random.normal(ks[5], (cond_ch,), jnp.float32),
        w2=0.3 * jax.random.normal(ks[6], (Cout, Cout, K), jnp.float32),
        b2=0.1 * jax.random.normal(ks[7], (Cout,), jnp.float32),
        g2=1.0 + 0.1 * jax.random.normal(ks[8], (Cout,), jnp.float32),
        be2=0.1 * jax.random.normal(ks[9], (Cout,), jnp.float32),
        wr=0.3 * jax.random.normal(ks[10], (Cout, Cin), jnp.float32),
        br=0.1 * jax.random.normal(ks[11], (Cout,), jnp.float32),
    )


if __name__ == "__main__":
    # --- test 1: tiny shapes, f32 MXU operands (checks the fused math) ---
    B, Cin, Cout, T, cond_dim, n_groups = 2, 4, 8, 16, 12, 4
    k0, k1, k2 = jax.random.split(jax.random.PRNGKey(0), 3)
    params = _make_params(k0, Cin, Cout, 3, cond_dim, True)
    x = jax.random.normal(k1, (B, Cin, T), jnp.float32)
    cond = jax.random.normal(k2, (B, cond_dim), jnp.float32)
    out = jax.block_until_ready(conditional_residual_block_1d(
        x, cond, params, n_groups=n_groups, cond_predict_scale=True,
        mxu_dtype=jnp.float32))
    ref = jax.block_until_ready(reference(
        x, cond, params, n_groups=n_groups, cond_predict_scale=True))
    assert out.shape == (B, Cout, T)
    # tolerance covers the approximate-reciprocal Mish rewrite (EUP vrcp path)
    np.testing.assert_allclose(np.asarray(out), np.asarray(ref), rtol=1e-2, atol=1e-2)

    # --- test 2: lane-dense channels (C >= 128, T % 8 == 0), bf16 MXU operands ---
    B, Cin, Cout, T, cond_dim, n_groups = 32, 128, 256, 16, 64, 8
    k0, k1, k2 = jax.random.split(jax.random.PRNGKey(1), 3)
    params = _make_params(k0, Cin, Cout, 3, cond_dim, True)
    x = jax.random.normal(k1, (B, Cin, T), jnp.float32)
    cond = jax.random.normal(k2, (B, cond_dim), jnp.float32)
    out = jax.block_until_ready(conditional_residual_block_1d(
        x, cond, params, n_groups=n_groups, cond_predict_scale=True,
        mxu_dtype=jnp.bfloat16))
    ref = jax.block_until_ready(reference(
        x, cond, params, n_groups=n_groups, cond_predict_scale=True))
    assert out.shape == (B, Cout, T)
    # bf16 MXU operands vs f32 reference -> tolerance scaled to the output magnitude
    s = float(np.std(np.asarray(ref)))
    np.testing.assert_allclose(np.asarray(out), np.asarray(ref),
                               rtol=5e-2, atol=5e-2 * s)

    print("KERNEL_OK")
</pallas_src>

<mosaic_0001>
module attributes {stable_mosaic.version = 11 : i64} {
  func.func @_crb_kernel(%arg0: i32, %arg1: memref<2x24x4xf32, #tpu.memory_space<vmem>>, %arg2: memref<2x1x8xf32, #tpu.memory_space<vmem>>, %arg3: memref<2x1x8xf32, #tpu.memory_space<vmem>>, %arg4: memref<3x4x8xf32, #tpu.memory_space<vmem>>, %arg5: memref<3x8x8xf32, #tpu.memory_space<vmem>>, %arg6: memref<4x8xf32, #tpu.memory_space<vmem>>, %arg7: memref<8x8xf32, #tpu.memory_space<vmem>>, %arg8: memref<8x4xf32, #tpu.memory_space<vmem>>, %arg9: memref<4x8xf32, #tpu.memory_space<vmem>>, %arg10: memref<2x16x8xf32, #tpu.memory_space<vmem>>, %arg11: memref<2x24x8xf32, #tpu.memory_space<vmem>>) attributes {dimension_semantics = [#tpu.dimension_semantics<parallel>], iteration_bounds = array<i64: 1>, scalar_prefetch = 0 : i64, scratch_operands = 1 : i64, tpu.core_type = #tpu.core_type<tc>, window_params = [{transform_indices = @transform_0, window_bounds = array<i64: 2, 24, 4>}, {transform_indices = @transform_1, window_bounds = array<i64: 2, 1, 8>}, {transform_indices = @transform_2, window_bounds = array<i64: 2, 1, 8>}, {pipeline_mode = #tpu.pipeline_mode<synchronous>, transform_indices = @transform_3, window_bounds = array<i64: 3, 4, 8>}, {pipeline_mode = #tpu.pipeline_mode<synchronous>, transform_indices = @transform_4, window_bounds = array<i64: 3, 8, 8>}, {pipeline_mode = #tpu.pipeline_mode<synchronous>, transform_indices = @transform_5, window_bounds = array<i64: 4, 8>}, {pipeline_mode = #tpu.pipeline_mode<synchronous>, transform_indices = @transform_6, window_bounds = array<i64: 8, 8>}, {pipeline_mode = #tpu.pipeline_mode<synchronous>, transform_indices = @transform_7, window_bounds = array<i64: 8, 4>}, {pipeline_mode = #tpu.pipeline_mode<synchronous>, transform_indices = @transform_8, window_bounds = array<i64: 4, 8>}, {transform_indices = @transform_9, window_bounds = array<i64: 2, 16, 8>}]} {
    %c0 = arith.constant 0 : index
    %c0_0 = arith.constant 0 : index
    %0 = vector.load %arg7[%c0, %c0_0] : memref<8x8xf32, #tpu.memory_space<vmem>>, vector<8x8xf32>
    %c0_1 = arith.constant 0 : index
    %c0_2 = arith.constant 0 : index
    %1 = vector.load %arg8[%c0_1, %c0_2] : memref<8x4xf32, #tpu.memory_space<vmem>>, vector<8x4xf32>
    %c0_3 = arith.constant 0 : index
    %c0_4 = arith.constant 0 : index
    %2 = vector.load %arg9[%c0_3, %c0_4] : memref<4x8xf32, #tpu.memory_space<vmem>>, vector<4x8xf32>
    %3 = vector.extract_strided_slice %0 {offsets = [0, 0], sizes = [1, 8], strides = [1, 1]} : vector<8x8xf32> to vector<1x8xf32>
    %c0_5 = arith.constant 0 : index
    %c0_6 = arith.constant 0 : index
    %c0_7 = arith.constant 0 : index
    %4 = vector.load %arg1[%c0_5, %c0_6, %c0_7] : memref<2x24x4xf32, #tpu.memory_space<vmem>>, vector<2x16x4xf32>
    %5 = vector.shape_cast %4 : vector<2x16x4xf32> to vector<32x4xf32>
    %c0_8 = arith.constant 0 : index
    %c0_9 = arith.constant 0 : index
    %c0_10 = arith.constant 0 : index
    %6 = vector.load %arg4[%c0_8, %c0_9, %c0_10] : memref<3x4x8xf32, #tpu.memory_space<vmem>>, vector<1x4x8xf32>
    %7 = vector.shape_cast %6 : vector<1x4x8xf32> to vector<4x8xf32>
    %cst = arith.constant dense<0.000000e+00> : vector<32x8xf32>
    %8 = tpu.matmul %5, %7, %cst {dimension_numbers = #tpu.dot_dimension_numbers<[1], [0], [0], [1], [0, 0, 1, 1], [], []>} : vector<32x4xf32>, vector<4x8xf32>, vector<32x8xf32> -> vector<32x8xf32>
    %c0_11 = arith.constant 0 : index
    %c1 = arith.constant 1 : index
    %c0_12 = arith.constant 0 : index
    %9 = vector.load %arg1[%c0_11, %c1, %c0_12] : memref<2x24x4xf32, #tpu.memory_space<vmem>>, vector<2x16x4xf32>
    %10 = vector.shape_cast %9 : vector<2x16x4xf32> to vector<32x4xf32>
    %c1_13 = arith.constant 1 : index
    %c0_14 = arith.constant 0 : index
    %c0_15 = arith.constant 0 : index
    %11 = vector.load %arg4[%c1_13, %c0_14, %c0_15] : memref<3x4x8xf32, #tpu.memory_space<vmem>>, vector<1x4x8xf32>
    %12 = vector.shape_cast %11 : vector<1x4x8xf32> to vector<4x8xf32>
    %cst_16 = arith.constant dense<0.000000e+00> : vector<32x8xf32>
    %13 = tpu.matmul %10, %12, %cst_16 {dimension_numbers = #tpu.dot_dimension_numbers<[1], [0], [0], [1], [0, 0, 1, 1], [], []>} : vector<32x4xf32>, vector<4x8xf32>, vector<32x8xf32> -> vector<32x8xf32>
    %14 = arith.addf %8, %13 : vector<32x8xf32>
    %c0_17 = arith.constant 0 : index
    %c2 = arith.constant 2 : index
    %c0_18 = arith.constant 0 : index
    %15 = vector.load %arg1[%c0_17, %c2, %c0_18] : memref<2x24x4xf32, #tpu.memory_space<vmem>>, vector<2x16x4xf32>
    %16 = vector.shape_cast %15 : vector<2x16x4xf32> to vector<32x4xf32>
    %c2_19 = arith.constant 2 : index
    %c0_20 = arith.constant 0 : index
    %c0_21 = arith.constant 0 : index
    %17 = vector.load %arg4[%c2_19, %c0_20, %c0_21] : memref<3x4x8xf32, #tpu.memory_space<vmem>>, vector<1x4x8xf32>
    %18 = vector.shape_cast %17 : vector<1x4x8xf32> to vector<4x8xf32>
    %cst_22 = arith.constant dense<0.000000e+00> : vector<32x8xf32>
    %19 = tpu.matmul %16, %18, %cst_22 {dimension_numbers = #tpu.dot_dimension_numbers<[1], [0], [0], [1], [0, 0, 1, 1], [], []>} : vector<32x4xf32>, vector<4x8xf32>, vector<32x8xf32> -> vector<32x8xf32>
    %20 = arith.addf %14, %19 : vector<32x8xf32>
    %21 = vector.broadcast %3 : vector<1x8xf32> to vector<32x8xf32>
    %22 = arith.addf %20, %21 : vector<32x8xf32>
    %23 = vector.shape_cast %22 : vector<32x8xf32> to vector<2x16x8xf32>
    %24 = vector.extract_strided_slice %0 {offsets = [1, 0], sizes = [1, 8], strides = [1, 1]} : vector<8x8xf32> to vector<1x8xf32>
    %25 = vector.extract_strided_slice %0 {offsets = [2, 0], sizes = [1, 8], strides = [1, 1]} : vector<8x8xf32> to vector<1x8xf32>
    %cst_23 = arith.constant dense<0.000000e+00> : vector<2x8xf32>
    %26 = vector.multi_reduction <add>, %23, %cst_23 [1] : vector<2x16x8xf32> to vector<2x8xf32>
    %cst_24 = arith.constant dense<0.000000e+00> : vector<2x4xf32>
    %27 = tpu.matmul %26, %1, %cst_24 {dimension_numbers = #tpu.dot_dimension_numbers<[1], [0], [0], [1], [0, 0, 1, 1], [], []>} : vector<2x8xf32>, vector<8x4xf32>, vector<2x4xf32> -> vector<2x4xf32>
    %cst_25 = arith.constant dense<0.000000e+00> : vector<2x8xf32>
    %28 = tpu.matmul %27, %2, %cst_25 {dimension_numbers = #tpu.dot_dimension_numbers<[1], [0], [0], [1], [0, 0, 1, 1], [], []>} : vector<2x4xf32>, vector<4x8xf32>, vector<2x8xf32> -> vector<2x8xf32>
    %29 = vector.shape_cast %28 : vector<2x8xf32> to vector<2x1x8xf32>
    %30 = vector.broadcast %29 : vector<2x1x8xf32> to vector<2x16x8xf32>
    %31 = arith.subf %23, %30 : vector<2x16x8xf32>
    %32 = arith.mulf %31, %31 : vector<2x16x8xf32>
    %cst_26 = arith.constant dense<0.000000e+00> : vector<2x8xf32>
    %33 = vector.multi_reduction <add>, %32, %cst_26 [1] : vector<2x16x8xf32> to vector<2x8xf32>
    %cst_27 = arith.constant dense<0.000000e+00> : vector<2x4xf32>
    %34 = tpu.matmul %33, %1, %cst_27 {dimension_numbers = #tpu.dot_dimension_numbers<[1], [0], [0], [1], [0, 0, 1, 1], [], []>} : vector<2x8xf32>, vector<8x4xf32>, vector<2x4xf32> -> vector<2x4xf32>
    %cst_28 = arith.constant dense<0.000000e+00> : vector<2x8xf32>
    %35 = tpu.matmul %34, %2, %cst_28 {dimension_numbers = #tpu.dot_dimension_numbers<[1], [0], [0], [1], [0, 0, 1, 1], [], []>} : vector<2x4xf32>, vector<4x8xf32>, vector<2x8xf32> -> vector<2x8xf32>
    %cst_29 = arith.constant 9.99999974E-6 : f32
    %36 = vector.broadcast %cst_29 : f32 to vector<2x8xf32>
    %37 = arith.addf %35, %36 : vector<2x8xf32>
    %38 = math.rsqrt %37 : vector<2x8xf32>
    %39 = vector.broadcast %24 : vector<1x8xf32> to vector<2x8xf32>
    %40 = arith.mulf %39, %38 : vector<2x8xf32>
    %41 = vector.shape_cast %40 : vector<2x8xf32> to vector<2x1x8xf32>
    %42 = vector.broadcast %41 : vector<2x1x8xf32> to vector<2x16x8xf32>
    %43 = arith.mulf %31, %42 : vector<2x16x8xf32>
    %44 = vector.shape_cast %25 : vector<1x8xf32> to vector<1x1x8xf32>
    %45 = vector.broadcast %44 : vector<1x1x8xf32> to vector<2x16x8xf32>
    %46 = arith.addf %43, %45 : vector<2x16x8xf32>
    %cst_30 = arith.constant 2.000000e+01 : f32
    %47 = vector.broadcast %cst_30 : f32 to vector<2x16x8xf32>
    %48 = arith.minimumf %46, %47 : vector<2x16x8xf32>
    %49 = math.exp %48 : vector<2x16x8xf32>
    %cst_31 = arith.constant 2.000000e+00 : f32
    %50 = vector.broadcast %cst_31 : f32 to vector<2x16x8xf32>
    %51 = arith.addf %50, %49 : vector<2x16x8xf32>
    %52 = arith.mulf %49, %51 : vector<2x16x8xf32>
    %53 = arith.mulf %46, %52 : vector<2x16x8xf32>
    %cst_32 = arith.constant 2.000000e+00 : f32
    %54 = vector.broadcast %cst_32 : f32 to vector<2x16x8xf32>
    %55 = arith.addf %52, %54 : vector<2x16x8xf32>
    %56 = tpu.reciprocal %55 {approx = true} : vector<2x16x8xf32> -> vector<2x16x8xf32>
    %57 = arith.mulf %53, %56 : vector<2x16x8xf32>
    %c0_33 = arith.constant 0 : index
    %c0_34 = arith.constant 0 : index
    %c0_35 = arith.constant 0 : index
    %58 = vector.load %arg2[%c0_33, %c0_34, %c0_35] : memref<2x1x8xf32, #tpu.memory_space<vmem>>, vector<2x1x8xf32>
    %59 = vector.broadcast %58 : vector<2x1x8xf32> to vector<2x16x8xf32>
    %60 = arith.mulf %59, %57 : vector<2x16x8xf32>
    %c0_36 = arith.constant 0 : index
    %c0_37 = arith.constant 0 : index
    %c0_38 = arith.constant 0 : index
    %61 = vector.load %arg3[%c0_36, %c0_37, %c0_38] : memref<2x1x8xf32, #tpu.memory_space<vmem>>, vector<2x1x8xf32>
    %62 = vector.broadcast %61 : vector<2x1x8xf32> to vector<2x16x8xf32>
    %63 = arith.addf %60, %62 : vector<2x16x8xf32>
    %cst_39 = arith.constant 0.000000e+00 : f32
    %64 = vector.broadcast %cst_39 : f32 to vector<2x1x8xf32>
    %c0_40 = arith.constant 0 : index
    %c0_41 = arith.constant 0 : index
    %c0_42 = arith.constant 0 : index
    %65 = vector.load %arg11[%c0_40, %c0_41, %c0_42] : memref<2x24x8xf32, #tpu.memory_space<vmem>>, vector<2x1x8xf32>
    tpu.vector_store %arg11[%c0_40, %c0_41, %c0_42], %64 {strides = array<i32>} : memref<2x24x8xf32, #tpu.memory_space<vmem>>, vector<2x1x8xf32>,
    %c0_43 = arith.constant 0 : index
    %c17 = arith.constant 17 : index
    %c0_44 = arith.constant 0 : index
    %66 = vector.load %arg11[%c0_43, %c17, %c0_44] : memref<2x24x8xf32, #tpu.memory_space<vmem>>, vector<2x1x8xf32>
    tpu.vector_store %arg11[%c0_43, %c17, %c0_44], %64 {strides = array<i32>} : memref<2x24x8xf32, #tpu.memory_space<vmem>>, vector<2x1x8xf32>,
    %c0_45 = arith.constant 0 : index
    %c1_46 = arith.constant 1 : index
    %c0_47 = arith.constant 0 : index
    %67 = vector.load %arg11[%c0_45, %c1_46, %c0_47] : memref<2x24x8xf32, #tpu.memory_space<vmem>>, vector<2x16x8xf32>
    tpu.vector_store %arg11[%c0_45, %c1_46, %c0_47], %63 {strides = array<i32>} : memref<2x24x8xf32, #tpu.memory_space<vmem>>, vector<2x16x8xf32>,
    %68 = vector.extract_strided_slice %0 {offsets = [3, 0], sizes = [1, 8], strides = [1, 1]} : vector<8x8xf32> to vector<1x8xf32>
    %c0_48 = arith.constant 0 : index
    %c0_49 = arith.constant 0 : index
    %c0_50 = arith.constant 0 : index
    %69 = vector.load %arg11[%c0_48, %c0_49, %c0_50] : memref<2x24x8xf32, #tpu.memory_space<vmem>>, vector<2x16x8xf32>
    %70 = vector.shape_cast %69 : vector<2x16x8xf32> to vector<32x8xf32>
    %c0_51 = arith.constant 0 : index
    %c0_52 = arith.constant 0 : index
    %c0_53 = arith.constant 0 : index
    %71 = vector.load %arg5[%c0_51, %c0_52, %c0_53] : memref<3x8x8xf32, #tpu.memory_space<vmem>>, vector<1x8x8xf32>
    %72 = vector.shape_cast %71 : vector<1x8x8xf32> to vector<8x8xf32>
    %cst_54 = arith.constant dense<0.000000e+00> : vector<32x8xf32>
    %73 = tpu.matmul %70, %72, %cst_54 {dimension_numbers = #tpu.dot_dimension_numbers<[1], [0], [0], [1], [0, 0, 1, 1], [], []>} : vector<32x8xf32>, vector<8x8xf32>, vector<32x8xf32> -> vector<32x8xf32>
    %c0_55 = arith.constant 0 : index
    %c1_56 = arith.constant 1 : index
    %c0_57 = arith.constant 0 : index
    %74 = vector.load %arg11[%c0_55, %c1_56, %c0_57] : memref<2x24x8xf32, #tpu.memory_space<vmem>>, vector<2x16x8xf32>
    %75 = vector.shape_cast %74 : vector<2x16x8xf32> to vector<32x8xf32>
    %c1_58 = arith.constant 1 : index
    %c0_59 = arith.constant 0 : index
    %c0_60 = arith.constant 0 : index
    %76 = vector.load %arg5[%c1_58, %c0_59, %c0_60] : memref<3x8x8xf32, #tpu.memory_space<vmem>>, vector<1x8x8xf32>
    %77 = vector.shape_cast %76 : vector<1x8x8xf32> to vector<8x8xf32>
    %cst_61 = arith.constant dense<0.000000e+00> : vector<32x8xf32>
    %78 = tpu.matmul %75, %77, %cst_61 {dimension_numbers = #tpu.dot_dimension_numbers<[1], [0], [0], [1], [0, 0, 1, 1], [], []>} : vector<32x8xf32>, vector<8x8xf32>, vector<32x8xf32> -> vector<32x8xf32>
    %79 = arith.addf %73, %78 : vector<32x8xf32>
    %c0_62 = arith.constant 0 : index
    %c2_63 = arith.constant 2 : index
    %c0_64 = arith.constant 0 : index
    %80 = vector.load %arg11[%c0_62, %c2_63, %c0_64] : memref<2x24x8xf32, #tpu.memory_space<vmem>>, vector<2x16x8xf32>
    %81 = vector.shape_cast %80 : vector<2x16x8xf32> to vector<32x8xf32>
    %c2_65 = arith.constant 2 : index
    %c0_66 = arith.constant 0 : index
    %c0_67 = arith.constant 0 : index
    %82 = vector.load %arg5[%c2_65, %c0_66, %c0_67] : memref<3x8x8xf32, #tpu.memory_space<vmem>>, vector<1x8x8xf32>
    %83 = vector.shape_cast %82 : vector<1x8x8xf32> to vector<8x8xf32>
    %cst_68 = arith.constant dense<0.000000e+00> : vector<32x8xf32>
    %84 = tpu.matmul %81, %83, %cst_68 {dimension_numbers = #tpu.dot_dimension_numbers<[1], [0], [0], [1], [0, 0, 1, 1], [], []>} : vector<32x8xf32>, vector<8x8xf32>, vector<32x8xf32> -> vector<32x8xf32>
    %85 = arith.addf %79, %84 : vector<32x8xf32>
    %86 = vector.broadcast %68 : vector<1x8xf32> to vector<32x8xf32>
    %87 = arith.addf %85, %86 : vector<32x8xf32>
    %88 = vector.shape_cast %87 : vector<32x8xf32> to vector<2x16x8xf32>
    %89 = vector.extract_strided_slice %0 {offsets = [4, 0], sizes = [1, 8], strides = [1, 1]} : vector<8x8xf32> to vector<1x8xf32>
    %90 = vector.extract_strided_slice %0 {offsets = [5, 0], sizes = [1, 8], strides = [1, 1]} : vector<8x8xf32> to vector<1x8xf32>
    %cst_69 = arith.constant dense<0.000000e+00> : vector<2x8xf32>
    %91 = vector.multi_reduction <add>, %88, %cst_69 [1] : vector<2x16x8xf32> to vector<2x8xf32>
    %cst_70 = arith.constant dense<0.000000e+00> : vector<2x4xf32>
    %92 = tpu.matmul %91, %1, %cst_70 {dimension_numbers = #tpu.dot_dimension_numbers<[1], [0], [0], [1], [0, 0, 1, 1], [], []>} : vector<2x8xf32>, vector<8x4xf32>, vector<2x4xf32> -> vector<2x4xf32>
    %cst_71 = arith.constant dense<0.000000e+00> : vector<2x8xf32>
    %93 = tpu.matmul %92, %2, %cst_71 {dimension_numbers = #tpu.dot_dimension_numbers<[1], [0], [0], [1], [0, 0, 1, 1], [], []>} : vector<2x4xf32>, vector<4x8xf32>, vector<2x8xf32> -> vector<2x8xf32>
    %94 = vector.shape_cast %93 : vector<2x8xf32> to vector<2x1x8xf32>
    %95 = vector.broadcast %94 : vector<2x1x8xf32> to vector<2x16x8xf32>
    %96 = arith.subf %88, %95 : vector<2x16x8xf32>
    %97 = arith.mulf %96, %96 : vector<2x16x8xf32>
    %cst_72 = arith.constant dense<0.000000e+00> : vector<2x8xf32>
    %98 = vector.multi_reduction <add>, %97, %cst_72 [1] : vector<2x16x8xf32> to vector<2x8xf32>
    %cst_73 = arith.constant dense<0.000000e+00> : vector<2x4xf32>
    %99 = tpu.matmul %98, %1, %cst_73 {dimension_numbers = #tpu.dot_dimension_numbers<[1], [0], [0], [1], [0, 0, 1, 1], [], []>} : vector<2x8xf32>, vector<8x4xf32>, vector<2x4xf32> -> vector<2x4xf32>
    %cst_74 = arith.constant dense<0.000000e+00> : vector<2x8xf32>
    %100 = tpu.matmul %99, %2, %cst_74 {dimension_numbers = #tpu.dot_dimension_numbers<[1], [0], [0], [1], [0, 0, 1, 1], [], []>} : vector<2x4xf32>, vector<4x8xf32>, vector<2x8xf32> -> vector<2x8xf32>
    %cst_75 = arith.constant 9.99999974E-6 : f32
    %101 = vector.broadcast %cst_75 : f32 to vector<2x8xf32>
    %102 = arith.addf %100, %101 : vector<2x8xf32>
    %103 = math.rsqrt %102 : vector<2x8xf32>
    %104 = vector.broadcast %89 : vector<1x8xf32> to vector<2x8xf32>
    %105 = arith.mulf %104, %103 : vector<2x8xf32>
    %106 = vector.shape_cast %105 : vector<2x8xf32> to vector<2x1x8xf32>
    %107 = vector.broadcast %106 : vector<2x1x8xf32> to vector<2x16x8xf32>
    %108 = arith.mulf %96, %107 : vector<2x16x8xf32>
    %109 = vector.shape_cast %90 : vector<1x8xf32> to vector<1x1x8xf32>
    %110 = vector.broadcast %109 : vector<1x1x8xf32> to vector<2x16x8xf32>
    %111 = arith.addf %108, %110 : vector<2x16x8xf32>
    %cst_76 = arith.constant 2.000000e+01 : f32
    %112 = vector.broadcast %cst_76 : f32 to vector<2x16x8xf32>
    %113 = arith.minimumf %111, %112 : vector<2x16x8xf32>
    %114 = math.exp %113 : vector<2x16x8xf32>
    %cst_77 = arith.constant 2.000000e+00 : f32
    %115 = vector.broadcast %cst_77 : f32 to vector<2x16x8xf32>
    %116 = arith.addf %115, %114 : vector<2x16x8xf32>
    %117 = arith.mulf %114, %116 : vector<2x16x8xf32>
    %118 = arith.mulf %111, %117 : vector<2x16x8xf32>
    %cst_78 = arith.constant 2.000000e+00 : f32
    %119 = vector.broadcast %cst_78 : f32 to vector<2x16x8xf32>
    %120 = arith.addf %117, %119 : vector<2x16x8xf32>
    %121 = tpu.reciprocal %120 {approx = true} : vector<2x16x8xf32> -> vector<2x16x8xf32>
    %122 = arith.mulf %118, %121 : vector<2x16x8xf32>
    %c0_79 = arith.constant 0 : index
    %c1_80 = arith.constant 1 : index
    %c0_81 = arith.constant 0 : index
    %123 = vector.load %arg1[%c0_79, %c1_80, %c0_81] : memref<2x24x4xf32, #tpu.memory_space<vmem>>, vector<2x16x4xf32>
    %124 = vector.shape_cast %123 : vector<2x16x4xf32> to vector<32x4xf32>
    %c0_82 = arith.constant 0 : index
    %c0_83 = arith.constant 0 : index
    %125 = vector.load %arg6[%c0_82, %c0_83] : memref<4x8xf32, #tpu.memory_space<vmem>>, vector<4x8xf32>
    %cst_84 = arith.constant dense<0.000000e+00> : vector<32x8xf32>
    %126 = tpu.matmul %124, %125, %cst_84 {dimension_numbers = #tpu.dot_dimension_numbers<[1], [0], [0], [1], [0, 0, 1, 1], [], []>} : vector<32x4xf32>, vector<4x8xf32>, vector<32x8xf32> -> vector<32x8xf32>
    %127 = vector.shape_cast %126 : vector<32x8xf32> to vector<2x16x8xf32>
    %128 = arith.addf %122, %127 : vector<2x16x8xf32>
    %129 = vector.extract_strided_slice %0 {offsets = [6, 0], sizes = [1, 8], strides = [1, 1]} : vector<8x8xf32> to vector<1x8xf32>
    %130 = vector.shape_cast %129 : vector<1x8xf32> to vector<1x1x8xf32>
    %131 = vector.broadcast %130 : vector<1x1x8xf32> to vector<2x16x8xf32>
    %132 = arith.addf %128, %131 : vector<2x16x8xf32>
    %c0_85 = arith.constant 0 : index
    %c0_86 = arith.constant 0 : index
    %c0_87 = arith.constant 0 : index
    %133 = vector.load %arg10[%c0_85, %c0_86, %c0_87] : memref<2x16x8xf32, #tpu.memory_space<vmem>>, vector<2x16x8xf32>
    tpu.vector_store %arg10[%c0_85, %c0_86, %c0_87], %132 {strides = array<i32>} : memref<2x16x8xf32, #tpu.memory_space<vmem>>, vector<2x16x8xf32>,
    return
  }
  func.func @transform_0(%arg0: i32) -> (i32, i32, i32) {
    %c0_i32 = arith.constant 0 : i32
    %c0_i32_0 = arith.constant 0 : i32
    %c0_i32_1 = arith.constant 0 : i32
    return %arg0, %c0_i32, %c0_i32_0 : i32, i32, i32
  }
  func.func @transform_1(%arg0: i32) -> (i32, i32, i32) {
    %c0_i32 = arith.constant 0 : i32
    %c0_i32_0 = arith.constant 0 : i32
    %c0_i32_1 = arith.constant 0 : i32
    return %arg0, %c0_i32, %c0_i32_0 : i32, i32, i32
  }
  func.func @transform_2(%arg0: i32) -> (i32, i32, i32) {
    %c0_i32 = arith.constant 0 : i32
    %c0_i32_0 = arith.constant 0 : i32
    %c0_i32_1 = arith.constant 0 : i32
    return %arg0, %c0_i32, %c0_i32_0 : i32, i32, i32
  }
  func.func @transform_3(%arg0: i32) -> (i32, i32, i32) {
    %c0_i32 = arith.constant 0 : i32
    %c0_i32_0 = arith.constant 0 : i32
    %c0_i32_1 = arith.constant 0 : i32
    %c0_i32_2 = arith.constant 0 : i32
    return %c0_i32, %c0_i32_0, %c0_i32_1 : i32, i32, i32
  }
  func.func @transform_4(%arg0: i32) -> (i32, i32, i32) {
    %c0_i32 = arith.constant 0 : i32
    %c0_i32_0 = arith.constant 0 : i32
    %c0_i32_1 = arith.constant 0 : i32
    %c0_i32_2 = arith.constant 0 : i32
    return %c0_i32, %c0_i32_0, %c0_i32_1 : i32, i32, i32
  }
  func.func @transform_5(%arg0: i32) -> (i32, i32) {
    %c0_i32 = arith.constant 0 : i32
    %c0_i32_0 = arith.constant 0 : i32
    %c0_i32_1 = arith.constant 0 : i32
    return %c0_i32, %c0_i32_0 : i32, i32
  }
  func.func @transform_6(%arg0: i32) -> (i32, i32) {
    %c0_i32 = arith.constant 0 : i32
    %c0_i32_0 = arith.constant 0 : i32
    %c0_i32_1 = arith.constant 0 : i32
    return %c0_i32, %c0_i32_0 : i32, i32
  }
  func.func @transform_7(%arg0: i32) -> (i32, i32) {
    %c0_i32 = arith.constant 0 : i32
    %c0_i32_0 = arith.constant 0 : i32
    %c0_i32_1 = arith.constant 0 : i32
    return %c0_i32, %c0_i32_0 : i32, i32
  }
  func.func @transform_8(%arg0: i32) -> (i32, i32) {
    %c0_i32 = arith.constant 0 : i32
    %c0_i32_0 = arith.constant 0 : i32
    %c0_i32_1 = arith.constant 0 : i32
    return %c0_i32, %c0_i32_0 : i32, i32
  }
  func.func @transform_9(%arg0: i32) -> (i32, i32, i32) {
    %c0_i32 = arith.constant 0 : i32
    %c0_i32_0 = arith.constant 0 : i32
    %c0_i32_1 = arith.constant 0 : i32
    return %arg0, %c0_i32, %c0_i32_0 : i32, i32, i32
  }
}

</mosaic_0001>

<llo_original>
// kernel: tpu_custom_call.1
$region0: #{tpu_custom_call.1}
  #allocation0 [shape = 'u32[]', space=smem, size = 0x4, offset = 0x4, fixed_abs, tag = 'smem constant byte address 0x4 - core index']
  #allocation1 [shape = 'u32[72,128]{1,0:T(1,128)}', space=vmem, size = 0x9000, scoped, tag = 'internal scratch']
  #allocation2 [shape = 'f32[2,24,8]{2,1,0:T(8,128)}', space=vmem, size = 0x6000, scoped, tag = 'scratch operand']
  %s0 = inlined_call_operand.vmem [shape: f32[2,24,4], index: 0, kind: input, shape index: {}]
  %s1 = inlined_call_operand.vmem [shape: f32[2,1,8], index: 1, kind: input, shape index: {}]
  %s2 = inlined_call_operand.vmem [shape: f32[2,1,8], index: 2, kind: input, shape index: {}]
  %s3 = inlined_call_operand.vmem [shape: f32[3,4,8], index: 3, kind: input, shape index: {}]
  %s4 = inlined_call_operand.vmem [shape: f32[3,8,8], index: 4, kind: input, shape index: {}]
  %s5 = inlined_call_operand.vmem [shape: f32[4,8], index: 5, kind: input, shape index: {}]
  %s6 = inlined_call_operand.vmem [shape: f32[8,8], index: 6, kind: input, shape index: {}]
  %s7 = inlined_call_operand.vmem [shape: f32[8,4], index: 7, kind: input, shape index: {}]
  %s8 = inlined_call_operand.vmem [shape: f32[4,8], index: 8, kind: input, shape index: {}]
  %s9 = inlined_call_operand.vmem [shape: f32[2,16,8], index: 9, kind: output, shape index: {}]
  %s10 = sld [smem:[#allocation0]]
  $region46: #{tpu_custom_call.1} parent=0
    _
  %s12 = ssub.s32 1, %s10
  %s13 = scalar_select 0, %s12, %s10
  // Predicated region
  $region2: #{tpu_custom_call.1} parent=0 // pred_check
    _
  $region3: #{tpu_custom_call.1} parent=0 // pred_check_branch
    %15 = sbr.rel (0) target = $region5
  $region4: #{tpu_custom_call.1} parent=0 // pred_region
    _
  $region5: #{tpu_custom_call.1} parent=0 // pred_fallthru
    _
  // Predicated region
  $region6: #{tpu_custom_call.1} parent=0 // pred_check
    _
  $region7: #{tpu_custom_call.1} parent=0 // pred_check_branch
    %17 = sbr.rel (0) target = $region9
  $region8: #{tpu_custom_call.1} parent=0 // pred_region
    _
  $region9: #{tpu_custom_call.1} parent=0 // pred_fallthru
    _
  // Predicated region
  $region10: #{tpu_custom_call.1} parent=0 // pred_check
    _
  $region11: #{tpu_custom_call.1} parent=0 // pred_check_branch
    %19 = sbr.rel (0) target = $region13
  $region12: #{tpu_custom_call.1} parent=0 // pred_region
    _
  $region13: #{tpu_custom_call.1} parent=0 // pred_fallthru
    _
  // Predicated region
  $region14: #{tpu_custom_call.1} parent=0 // pred_check
    _
  $region15: #{tpu_custom_call.1} parent=0 // pred_check_branch
    %21 = sbr.rel (0) target = $region17
  $region16: #{tpu_custom_call.1} parent=0 // pred_region
    _
  $region17: #{tpu_custom_call.1} parent=0 // pred_fallthru
    _
  // Predicated region
  $region18: #{tpu_custom_call.1} parent=0 // pred_check
    _
  $region19: #{tpu_custom_call.1} parent=0 // pred_check_branch
    %23 = sbr.rel (0) target = $region21
  $region20: #{tpu_custom_call.1} parent=0 // pred_region
    _
  $region21: #{tpu_custom_call.1} parent=0 // pred_fallthru
    _
  // Predicated region
  $region22: #{tpu_custom_call.1} parent=0 // pred_check
    _
  $region23: #{tpu_custom_call.1} parent=0 // pred_check_branch
    %25 = sbr.rel (0) target = $region25
  $region24: #{tpu_custom_call.1} parent=0 // pred_region
    _
  $region25: #{tpu_custom_call.1} parent=0 // pred_fallthru
    _
  // Predicated region
  $region26: #{tpu_custom_call.1} parent=0 // pred_check
    _
  $region27: #{tpu_custom_call.1} parent=0 // pred_check_branch
    %27 = sbr.rel (0) target = $region29
  $region28: #{tpu_custom_call.1} parent=0 // pred_region
    _
  $region29: #{tpu_custom_call.1} parent=0 // pred_fallthru
    _
  // Predicated region
  $region30: #{tpu_custom_call.1} parent=0 // pred_check
    _
  $region31: #{tpu_custom_call.1} parent=0 // pred_check_branch
    %29 = sbr.rel (0) target = $region33
  $region32: #{tpu_custom_call.1} parent=0 // pred_region
    _
  $region33: #{tpu_custom_call.1} parent=0 // pred_fallthru
    _
  // Predicated region
  $region34: #{tpu_custom_call.1} parent=0 // pred_check
    _
  $region35: #{tpu_custom_call.1} parent=0 // pred_check_branch
    %31 = sbr.rel (0) target = $region37
  $region36: #{tpu_custom_call.1} parent=0 // pred_region
    _
  $region37: #{tpu_custom_call.1} parent=0 // pred_fallthru
    _
  %v32 = vld [vmem:[%s6] sm:$0xff]
  %v33 = vld [vmem:[%s7] sm:$0xff]
  %v34 = vld [vmem:[%s8] sm:$0xf]
  %v35 = vld [vmem:[%s0] sm:$0xff]
  %v36 = vld [vmem:[%s0 + $0x8] sm:$0xff]
  %v37 = vld [vmem:[%s0 + $0x18] sm:$0xff]
  %v38 = vld [vmem:[%s0 + $0x20] sm:$0xff]
  %v39 = vld [vmem:[%s3] sm:$0xf]
  %v40 = vld [vmem:[%s0 + $0x1] sm:$0xff]
  %v41 = vld [vmem:[%s0 + $0x9] sm:$0xff]
  %v42 = vld [vmem:[%s0 + $0x19] sm:$0xff]
  %v43 = vld [vmem:[%s0 + $0x21] sm:$0xff]
  %s44 = scalar_lea.vmem %s3, 4
  %v45 = vld [vmem:[%s44] sm:$0xf]
  %vm46 = vcmask 31744
  %v48 = vsel %vm46, %v40, 0
  %v51 = vsel %vm46, %v41, 0
  %v54 = vsel %vm46, %v42, 0
  %v57 = vsel %vm46, %v43, 0
  %vm59 = vcmask 1043456
  %v61 = vsel %vm59, %v45, 0
  %63 = vmatpush.msra.mxu0 0.0
  %64 = vmatpush.msra.mxu0 0.0
  %65 = vmatpush.msra.mxu0 0.0
  %66 = vmatpush.msra.mxu0 0.0
  %67 = vmatpush.msra.mxu0 0.0
  %68 = vmatpush.msra.mxu0 0.0
  %69 = vmatpush.msra.mxu0 0.0
  %70 = vmatpush.msra.mxu0 0.0
  %71 = vmatpush.msra.mxu0 0.0
  %72 = vmatpush.msra.mxu0 0.0
  %73 = vmatpush.msra.mxu0 0.0
  %74 = vmatpush.msra.mxu0 0.0
  %75 = vmatpush.msra.mxu0 0.0
  %76 = vmatpush.msra.mxu0 0.0
  %77 = vmatpush.msra.mxu0 0.0
  %78 = vmatpush.msra.mxu0 %v61
  %79 = vmatmul.f32.gmra.mxu0 %v48
  %v80 = vpop.f32.mrf.mxu0
  %v81 = vadd.f32 0.0, %v80
  %82 = vmatmul.f32.gmra.mxu0 %v51
  %v83 = vpop.f32.mrf.mxu0
  %v84 = vadd.f32 0.0, %v83
  %85 = vmatmul.f32.gmra.mxu0 %v54
  %v86 = vpop.f32.mrf.mxu0
  %v87 = vadd.f32 0.0, %v86
  %88 = vmatmul.f32.gmra.mxu0 %v57
  %v89 = vpop.f32.mrf.mxu0
  %v90 = vadd.f32 0.0, %v89
  %91 = vdwg.mxu0
  %v93 = vsel %vm46, %v35, 0
  %v96 = vsel %vm46, %v36, 0
  %v99 = vsel %vm46, %v37, 0
  %v102 = vsel %vm46, %v38, 0
  %v105 = vsel %vm59, %v39, 0
  %107 = vmatpush.msra.mxu0 0.0
  %108 = vmatpush.msra.mxu0 0.0
  %109 = vmatpush.msra.mxu0 0.0
  %110 = vmatpush.msra.mxu0 0.0
  %111 = vmatpush.msra.mxu0 0.0
  %112 = vmatpush.msra.mxu0 0.0
  %113 = vmatpush.msra.mxu0 0.0
  %114 = vmatpush.msra.mxu0 0.0
  %115 = vmatpush.msra.mxu0 0.0
  %116 = vmatpush.msra.mxu0 0.0
  %117 = vmatpush.msra.mxu0 0.0
  %118 = vmatpush.msra.mxu0 0.0
  %119 = vmatpush.msra.mxu0 0.0
  %120 = vmatpush.msra.mxu0 0.0
  %121 = vmatpush.msra.mxu0 0.0
  %122 = vmatpush.msra.mxu0 %v105
  %123 = vmatmul.f32.gmra.mxu0 %v93
  %v124 = vpop.f32.mrf.mxu0
  %v125 = vadd.f32 %v81, %v124
  %126 = vmatmul.f32.gmra.mxu0 %v96
  %v127 = vpop.f32.mrf.mxu0
  %v128 = vadd.f32 %v84, %v127
  %129 = vmatmul.f32.gmra.mxu0 %v99
  %v130 = vpop.f32.mrf.mxu0
  %v131 = vadd.f32 %v87, %v130
  %132 = vmatmul.f32.gmra.mxu0 %v102
  %v133 = vpop.f32.mrf.mxu0
  %v134 = vadd.f32 %v90, %v133
  %135 = vdwg.mxu0
  %v136 = vld [vmem:[%s0 + $0x2] sm:$0xff]
  %v137 = vld [vmem:[%s0 + $0xa] sm:$0xff]
  %v138 = vld [vmem:[%s0 + $0x1a] sm:$0xff]
  %v139 = vld [vmem:[%s0 + $0x22] sm:$0xff]
  %s140 = scalar_lea.vmem %s3, 8
  %v141 = vld [vmem:[%s140] sm:$0xf]
  %v143 = vsel %vm46, %v136, 0
  %v146 = vsel %vm46, %v137, 0
  %v149 = vsel %vm46, %v138, 0
  %v152 = vsel %vm46, %v139, 0
  %v155 = vsel %vm59, %v141, 0
  %157 = vmatpush.msra.mxu0 0.0
  %158 = vmatpush.msra.mxu0 0.0
  %159 = vmatpush.msra.mxu0 0.0
  %160 = vmatpush.msra.mxu0 0.0
  %161 = vmatpush.msra.mxu0 0.0
  %162 = vmatpush.msra.mxu0 0.0
  %163 = vmatpush.msra.mxu0 0.0
  %164 = vmatpush.msra.mxu0 0.0
  %165 = vmatpush.msra.mxu0 0.0
  %166 = vmatpush.msra.mxu0 0.0
  %167 = vmatpush.msra.mxu0 0.0
  %168 = vmatpush.msra.mxu0 0.0
  %169 = vmatpush.msra.mxu0 0.0
  %170 = vmatpush.msra.mxu0 0.0
  %171 = vmatpush.msra.mxu0 0.0
  %172 = vmatpush.msra.mxu0 %v155
  %173 = vmatmul.f32.gmra.mxu0 %v143
  %v174 = vpop.f32.mrf.mxu0
  %v175 = vadd.f32 0.0, %v174
  %176 = vmatmul.f32.gmra.mxu0 %v146
  %v177 = vpop.f32.mrf.mxu0
  %v178 = vadd.f32 0.0, %v177
  %179 = vmatmul.f32.gmra.mxu0 %v149
  %v180 = vpop.f32.mrf.mxu0
  %v181 = vadd.f32 0.0, %v180
  %182 = vmatmul.f32.gmra.mxu0 %v152
  %v183 = vpop.f32.mrf.mxu0
  %v184 = vadd.f32 0.0, %v183
  %185 = vdwg.mxu0
  %v186 = vadd.f32 %v125, %v175
  %v187 = vadd.f32 %v128, %v178
  %v188 = vadd.f32 %v131, %v181
  %v189 = vadd.f32 %v134, %v184
  %v190 = vperm.slane %v32, 0
  %v191 = vadd.f32 %v186, %v190
  %v192 = vadd.f32 %v187, %v190
  %v193 = vadd.f32 %v188, %v190
  %v194 = vadd.f32 %v189, %v190
  %vm195 = vcmask 64512
  %v196 = vsel %vm195, %v191, 0.0
  %v197 = vsel %vm195, %v192, 0.0
  %v198 = vadd.f32 %v196, %v197
  %v199 = vrot.slane %v198, 4
  %v200 = vadd.f32 %v198, %v199
  %v201 = vrot.slane %v200, 2
  %v202 = vadd.f32 %v200, %v201
  %v203 = vrot.slane %v202, 1
  %v204 = vadd.f32 %v202, %v203
  %v205 = vsel %vm195, %v193, 0.0
  %v206 = vsel %vm195, %v194, 0.0
  %v207 = vadd.f32 %v205, %v206
  %v208 = vrot.slane %v207, 4
  %v209 = vadd.f32 %v207, %v208
  %v210 = vrot.slane %v209, 2
  %v211 = vadd.f32 %v209, %v210
  %v212 = vrot.slane %v211, 1
  %v213 = vadd.f32 %v211, %v212
  %vm216 = vcmask 1041409
  %v217 = vsel %vm216, %v213, %v204
  %v218 = vsel %vm195, %v217, 0
  %220 = vmatpush.msra.mxu0 0.0
  %221 = vmatpush.msra.mxu0 0.0
  %222 = vmatpush.msra.mxu0 0.0
  %223 = vmatpush.msra.mxu0 0.0
  %224 = vmatpush.msra.mxu0 0.0
  %225 = vmatpush.msra.mxu0 0.0
  %226 = vmatpush.msra.mxu0 0.0
  %227 = vmatpush.msra.mxu0 0.0
  %228 = vmatpush.msra.mxu0 0.0
  %229 = vmatpush.msra.mxu0 0.0
  %230 = vmatpush.msra.mxu0 0.0
  %231 = vmatpush.msra.mxu0 0.0
  %232 = vmatpush.msra.mxu0 0.0
  %233 = vmatpush.msra.mxu0 0.0
  %234 = vmatpush.msra.mxu0 0.0
  %235 = vmatpush.msra.mxu0 %v33
  %236 = vmatmul.f32.gmra.mxu0 %v218
  %v237 = vpop.f32.mrf.mxu0
  %v238 = vadd.f32 0.0, %v237
  %239 = vdwg.mxu0
  %v241 = vsel %vm46, %v238, 0
  %v244 = vsel %vm59, %v34, 0
  %246 = vmatpush.msra.mxu0 0.0
  %247 = vmatpush.msra.mxu0 0.0
  %248 = vmatpush.msra.mxu0 0.0
  %249 = vmatpush.msra.mxu0 0.0
  %250 = vmatpush.msra.mxu0 0.0
  %251 = vmatpush.msra.mxu0 0.0
  %252 = vmatpush.msra.mxu0 0.0
  %253 = vmatpush.msra.mxu0 0.0
  %254 = vmatpush.msra.mxu0 0.0
  %255 = vmatpush.msra.mxu0 0.0
  %256 = vmatpush.msra.mxu0 0.0
  %257 = vmatpush.msra.mxu0 0.0
  %258 = vmatpush.msra.mxu0 0.0
  %259 = vmatpush.msra.mxu0 0.0
  %260 = vmatpush.msra.mxu0 0.0
  %261 = vmatpush.msra.mxu0 %v244
  %262 = vmatmul.f32.gmra.mxu0 %v241
  %v263 = vpop.f32.mrf.mxu0
  %v264 = vadd.f32 0.0, %v263
  %265 = vdwg.mxu0
  %v267 = vrot.slane %v264, 1
  %v268 = vperm.slane %v264, 0
  %v269 = vperm.slane %v267, 0
  %v272 = vsub.f32 %v191, %v268
  %v273 = vsub.f32 %v192, %v268
  %v274 = vsub.f32 %v193, %v269
  %v275 = vsub.f32 %v194, %v269
  %v276 = vmul.f32 %v272, %v272
  %v277 = vmul.f32 %v273, %v273
  %v278 = vmul.f32 %v274, %v274
  %v279 = vmul.f32 %v275, %v275
  %v280 = vsel %vm195, %v276, 0.0
  %v281 = vsel %vm195, %v277, 0.0
  %v282 = vadd.f32 %v280, %v281
  %v283 = vrot.slane %v282, 4
  %v284 = vadd.f32 %v282, %v283
  %v285 = vrot.slane %v284, 2
  %v286 = vadd.f32 %v284, %v285
  %v287 = vrot.slane %v286, 1
  %v288 = vadd.f32 %v286, %v287
  %v289 = vsel %vm195, %v278, 0.0
  %v290 = vsel %vm195, %v279, 0.0
  %v291 = vadd.f32 %v289, %v290
  %v292 = vrot.slane %v291, 4
  %v293 = vadd.f32 %v291, %v292
  %v294 = vrot.slane %v293, 2
  %v295 = vadd.f32 %v293, %v294
  %v296 = vrot.slane %v295, 1
  %v297 = vadd.f32 %v295, %v296
  %v300 = vsel %vm216, %v297, %v288
  %v301 = vsel %vm195, %v300, 0
  %303 = vmatpush.msra.mxu0 0.0
  %304 = vmatpush.msra.mxu0 0.0
  %305 = vmatpush.msra.mxu0 0.0
  %306 = vmatpush.msra.mxu0 0.0
  %307 = vmatpush.msra.mxu0 0.0
  %308 = vmatpush.msra.mxu0 0.0
  %309 = vmatpush.msra.mxu0 0.0
  %310 = vmatpush.msra.mxu0 0.0
  %311 = vmatpush.msra.mxu0 0.0
  %312 = vmatpush.msra.mxu0 0.0
  %313 = vmatpush.msra.mxu0 0.0
  %314 = vmatpush.msra.mxu0 0.0
  %315 = vmatpush.msra.mxu0 0.0
  %316 = vmatpush.msra.mxu0 0.0
  %317 = vmatpush.msra.mxu0 0.0
  %318 = vmatpush.msra.mxu0 %v33
  %319 = vmatmul.f32.gmra.mxu0 %v301
  %v320 = vpop.f32.mrf.mxu0
  %v321 = vadd.f32 0.0, %v320
  %322 = vdwg.mxu0
  %v324 = vsel %vm46, %v321, 0
  %326 = vmatpush.msra.mxu0 0.0
  %327 = vmatpush.msra.mxu0 0.0
  %328 = vmatpush.msra.mxu0 0.0
  %329 = vmatpush.msra.mxu0 0.0
  %330 = vmatpush.msra.mxu0 0.0
  %331 = vmatpush.msra.mxu0 0.0
  %332 = vmatpush.msra.mxu0 0.0
  %333 = vmatpush.msra.mxu0 0.0
  %334 = vmatpush.msra.mxu0 0.0
  %335 = vmatpush.msra.mxu0 0.0
  %336 = vmatpush.msra.mxu0 0.0
  %337 = vmatpush.msra.mxu0 0.0
  %338 = vmatpush.msra.mxu0 0.0
  %339 = vmatpush.msra.mxu0 0.0
  %340 = vmatpush.msra.mxu0 0.0
  %341 = vmatpush.msra.mxu0 %v244
  %342 = vmatmul.f32.gmra.mxu0 %v324
  %v343 = vpop.f32.mrf.mxu0
  %v344 = vadd.f32 1e-05, %v343
  %345 = vdwg.mxu0
  %v346 = vrsqrt.pop %v344
  %v347 = vmul.f32 %v346, %v344
  %v348 = vmul.f32 %v347, %v346
  %v349 = vmul.f32 0.5, %v348
  %v350 = vsub.f32 1.5, %v349
  %v351 = vmul.f32 %v346, %v350
  %vm352 = vweird.f32 %v344
  %vm353 = vweird.f32 %v346
  %vm354 = vmor %vm352, %vm353
  %v355 = vsel %vm354, %v346, %v351
  %v356 = vperm.slane %v32, 1
  %v357 = vmul.f32 %v356, %v355
  %v359 = vrot.slane %v357, 1
  %v360 = vperm.slane %v357, 0
  %v361 = vperm.slane %v359, 0
  %v364 = vmul.f32 %v272, %v360
  %v365 = vmul.f32 %v273, %v360
  %v366 = vmul.f32 %v274, %v361
  %v367 = vmul.f32 %v275, %v361
  %v368 = vperm.slane %v32, 2
  %v369 = vadd.f32 %v364, %v368
  %v370 = vadd.f32 %v365, %v368
  %v371 = vadd.f32 %v366, %v368
  %v372 = vadd.f32 %v367, %v368
  %v373 = vmin.f32 %v369, 20.0
  %v374 = vmin.f32 %v370, 20.0
  %v375 = vmin.f32 %v371, 20.0
  %v376 = vmin.f32 %v372, 20.0
  %v377 = vmul.f32 %v373, 1.442695
  %v378 = vpow.pop %v377
  %v379 = vmul.f32 %v374, 1.442695
  %v380 = vpow.pop %v379
  %v381 = vmul.f32 %v375, 1.442695
  %v382 = vpow.pop %v381
  %v383 = vmul.f32 %v376, 1.442695
  %v384 = vpow.pop %v383
  %v385 = vadd.f32 %v378, 2.0
  %v386 = vadd.f32 %v380, 2.0
  %v387 = vadd.f32 %v382, 2.0
  %v388 = vadd.f32 %v384, 2.0
  %v389 = vmul.f32 %v378, %v385
  %v390 = vmul.f32 %v380, %v386
  %v391 = vmul.f32 %v382, %v387
  %v392 = vmul.f32 %v384, %v388
  %v393 = vmul.f32 %v369, %v389
  %v394 = vmul.f32 %v370, %v390
  %v395 = vmul.f32 %v371, %v391
  %v396 = vmul.f32 %v372, %v392
  %v397 = vadd.f32 %v389, 2.0
  %v398 = vadd.f32 %v390, 2.0
  %v399 = vadd.f32 %v391, 2.0
  %v400 = vadd.f32 %v392, 2.0
  %v401 = vrcp.pop %v397
  %v402 = vrcp.pop %v398
  %v403 = vrcp.pop %v399
  %v404 = vrcp.pop %v400
  %v405 = vmul.f32 %v393, %v401
  %v406 = vmul.f32 %v394, %v402
  %v407 = vmul.f32 %v395, %v403
  %v408 = vmul.f32 %v396, %v404
  %v409 = vld [vmem:[%s1] sm:$0x1]
  %v410 = vld [vmem:[%s1 + $0x1] sm:$0x1]
  %v413 = vperm.slane %v409, 0
  %v414 = vperm.slane %v410, 0
  %v417 = vmul.f32 %v413, %v405
  %v418 = vmul.f32 %v413, %v406
  %v419 = vmul.f32 %v414, %v407
  %v420 = vmul.f32 %v414, %v408
  %v421 = vld [vmem:[%s2] sm:$0x1]
  %v422 = vld [vmem:[%s2 + $0x1] sm:$0x1]
  %v425 = vperm.slane %v421, 0
  %v426 = vperm.slane %v422, 0
  %v429 = vadd.f32 %v417, %v425
  %v430 = vadd.f32 %v418, %v425
  %v431 = vadd.f32 %v419, %v426
  %v432 = vadd.f32 %v420, %v426
  %vm433 = vcmask 57344
  %434 = vst.msk [vmem:[#allocation2] sm:$0x1] %vm433, 0.0
  %435 = vst.msk [vmem:[#allocation2 + $0x18] sm:$0x1] %vm433, 0.0
  %436 = vst.msk [vmem:[#allocation2 + $0x11] sm:$0x1] %vm433, 0.0
  %437 = vst.msk [vmem:[#allocation2 + $0x29] sm:$0x1] %vm433, 0.0
  %438 = vst.msk [vmem:[#allocation2 + $0x1] sm:$0xff] %vm195, %v429
  %439 = vst.msk [vmem:[#allocation2 + $0x9] sm:$0xff] %vm195, %v430
  %440 = vst.msk [vmem:[#allocation2 + $0x19] sm:$0xff] %vm195, %v431
  %441 = vst.msk [vmem:[#allocation2 + $0x21] sm:$0xff] %vm195, %v432
  %v442 = vld [vmem:[#allocation2] sm:$0xff]
  %v443 = vld [vmem:[#allocation2 + $0x8] sm:$0xff]
  %v444 = vld [vmem:[#allocation2 + $0x18] sm:$0xff]
  %v445 = vld [vmem:[#allocation2 + $0x20] sm:$0xff]
  %v446 = vld [vmem:[%s4] sm:$0xff]
  %v447 = vld [vmem:[#allocation2 + $0x1] sm:$0xff]
  %v448 = vld [vmem:[#allocation2 + $0x9] sm:$0xff]
  %v449 = vld [vmem:[#allocation2 + $0x19] sm:$0xff]
  %v450 = vld [vmem:[#allocation2 + $0x21] sm:$0xff]
  %s451 = scalar_lea.vmem %s4, 8
  %v452 = vld [vmem:[%s451] sm:$0xff]
  %v454 = vsel %vm195, %v447, 0
  %v457 = vsel %vm195, %v448, 0
  %v460 = vsel %vm195, %v449, 0
  %v463 = vsel %vm195, %v450, 0
  %465 = vmatpush.msra.mxu0 0.0
  %466 = vmatpush.msra.mxu0 0.0
  %467 = vmatpush.msra.mxu0 0.0
  %468 = vmatpush.msra.mxu0 0.0
  %469 = vmatpush.msra.mxu0 0.0
  %470 = vmatpush.msra.mxu0 0.0
  %471 = vmatpush.msra.mxu0 0.0
  %472 = vmatpush.msra.mxu0 0.0
  %473 = vmatpush.msra.mxu0 0.0
  %474 = vmatpush.msra.mxu0 0.0
  %475 = vmatpush.msra.mxu0 0.0
  %476 = vmatpush.msra.mxu0 0.0
  %477 = vmatpush.msra.mxu0 0.0
  %478 = vmatpush.msra.mxu0 0.0
  %479 = vmatpush.msra.mxu0 0.0
  %480 = vmatpush.msra.mxu0 %v452
  %481 = vmatmul.f32.gmra.mxu0 %v454
  %v482 = vpop.f32.mrf.mxu0
  %v483 = vadd.f32 0.0, %v482
  %484 = vmatmul.f32.gmra.mxu0 %v457
  %v485 = vpop.f32.mrf.mxu0
  %v486 = vadd.f32 0.0, %v485
  %487 = vmatmul.f32.gmra.mxu0 %v460
  %v488 = vpop.f32.mrf.mxu0
  %v489 = vadd.f32 0.0, %v488
  %490 = vmatmul.f32.gmra.mxu0 %v463
  %v491 = vpop.f32.mrf.mxu0
  %v492 = vadd.f32 0.0, %v491
  %493 = vdwg.mxu0
  %v495 = vsel %vm195, %v442, 0
  %v498 = vsel %vm195, %v443, 0
  %v501 = vsel %vm195, %v444, 0
  %v504 = vsel %vm195, %v445, 0
  %506 = vmatpush.msra.mxu0 0.0
  %507 = vmatpush.msra.mxu0 0.0
  %508 = vmatpush.msra.mxu0 0.0
  %509 = vmatpush.msra.mxu0 0.0
  %510 = vmatpush.msra.mxu0 0.0
  %511 = vmatpush.msra.mxu0 0.0
  %512 = vmatpush.msra.mxu0 0.0
  %513 = vmatpush.msra.mxu0 0.0
  %514 = vmatpush.msra.mxu0 0.0
  %515 = vmatpush.msra.mxu0 0.0
  %516 = vmatpush.msra.mxu0 0.0
  %517 = vmatpush.msra.mxu0 0.0
  %518 = vmatpush.msra.mxu0 0.0
  %519 = vmatpush.msra.mxu0 0.0
  %520 = vmatpush.msra.mxu0 0.0
  %521 = vmatpush.msra.mxu0 %v446
  %522 = vmatmul.f32.gmra.mxu0 %v495
  %v523 = vpop.f32.mrf.mxu0
  %v524 = vadd.f32 %v483, %v523
  %525 = vmatmul.f32.gmra.mxu0 %v498
  %v526 = vpop.f32.mrf.mxu0
  %v527 = vadd.f32 %v486, %v526
  %528 = vmatmul.f32.gmra.mxu0 %v501
  %v529 = vpop.f32.mrf.mxu0
  %v530 = vadd.f32 %v489, %v529
  %531 = vmatmul.f32.gmra.mxu0 %v504
  %v532 = vpop.f32.mrf.mxu0
  %v533 = vadd.f32 %v492, %v532
  %534 = vdwg.mxu0
  %v535 = vld [vmem:[#allocation2 + $0x2] sm:$0xff]
  %v536 = vld [vmem:[#allocation2 + $0xa] sm:$0xff]
  %v537 = vld [vmem:[#allocation2 + $0x1a] sm:$0xff]
  %v538 = vld [vmem:[#allocation2 + $0x22] sm:$0xff]
  %s539 = scalar_lea.vmem %s4, 16
  %v540 = vld [vmem:[%s539] sm:$0xff]
  %v542 = vsel %vm195, %v535, 0
  %v545 = vsel %vm195, %v536, 0
  %v548 = vsel %vm195, %v537, 0
  %v551 = vsel %vm195, %v538, 0
  %553 = vmatpush.msra.mxu0 0.0
  %554 = vmatpush.msra.mxu0 0.0
  %555 = vmatpush.msra.mxu0 0.0
  %556 = vmatpush.msra.mxu0 0.0
  %557 = vmatpush.msra.mxu0 0.0
  %558 = vmatpush.msra.mxu0 0.0
  %559 = vmatpush.msra.mxu0 0.0
  %560 = vmatpush.msra.mxu0 0.0
  %561 = vmatpush.msra.mxu0 0.0
  %562 = vmatpush.msra.mxu0 0.0
  %563 = vmatpush.msra.mxu0 0.0
  %564 = vmatpush.msra.mxu0 0.0
  %565 = vmatpush.msra.mxu0 0.0
  %566 = vmatpush.msra.mxu0 0.0
  %567 = vmatpush.msra.mxu0 0.0
  %568 = vmatpush.msra.mxu0 %v540
  %569 = vmatmul.f32.gmra.mxu0 %v542
  %v570 = vpop.f32.mrf.mxu0
  %v571 = vadd.f32 0.0, %v570
  %572 = vmatmul.f32.gmra.mxu0 %v545
  %v573 = vpop.f32.mrf.mxu0
  %v574 = vadd.f32 0.0, %v573
  %575 = vmatmul.f32.gmra.mxu0 %v548
  %v576 = vpop.f32.mrf.mxu0
  %v577 = vadd.f32 0.0, %v576
  %578 = vmatmul.f32.gmra.mxu0 %v551
  %v579 = vpop.f32.mrf.mxu0
  %v580 = vadd.f32 0.0, %v579
  %581 = vdwg.mxu0
  %v582 = vadd.f32 %v524, %v571
  %v583 = vadd.f32 %v527, %v574
  %v584 = vadd.f32 %v530, %v577
  %v585 = vadd.f32 %v533, %v580
  %v586 = vperm.slane %v32, 3
  %v587 = vadd.f32 %v582, %v586
  %v588 = vadd.f32 %v583, %v586
  %v589 = vadd.f32 %v584, %v586
  %v590 = vadd.f32 %v585, %v586
  %v591 = vsel %vm195, %v587, 0.0
  %v592 = vsel %vm195, %v588, 0.0
  %v593 = vadd.f32 %v591, %v592
  %v594 = vrot.slane %v593, 4
  %v595 = vadd.f32 %v593, %v594
  %v596 = vrot.slane %v595, 2
  %v597 = vadd.f32 %v595, %v596
  %v598 = vrot.slane %v597, 1
  %v599 = vadd.f32 %v597, %v598
  %v600 = vsel %vm195, %v589, 0.0
  %v601 = vsel %vm195, %v590, 0.0
  %v602 = vadd.f32 %v600, %v601
  %v603 = vrot.slane %v602, 4
  %v604 = vadd.f32 %v602, %v603
  %v605 = vrot.slane %v604, 2
  %v606 = vadd.f32 %v604, %v605
  %v607 = vrot.slane %v606, 1
  %v608 = vadd.f32 %v606, %v607
  %v611 = vsel %vm216, %v608, %v599
  %v612 = vsel %vm195, %v611, 0
  %614 = vmatpush.msra.mxu0 0.0
  %615 = vmatpush.msra.mxu0 0.0
  %616 = vmatpush.msra.mxu0 0.0
  %617 = vmatpush.msra.mxu0 0.0
  %618 = vmatpush.msra.mxu0 0.0
  %619 = vmatpush.msra.mxu0 0.0
  %620 = vmatpush.msra.mxu0 0.0
  %621 = vmatpush.msra.mxu0 0.0
  %622 = vmatpush.msra.mxu0 0.0
  %623 = vmatpush.msra.mxu0 0.0
  %624 = vmatpush.msra.mxu0 0.0
  %625 = vmatpush.msra.mxu0 0.0
  %626 = vmatpush.msra.mxu0 0.0
  %627 = vmatpush.msra.mxu0 0.0
  %628 = vmatpush.msra.mxu0 0.0
  %629 = vmatpush.msra.mxu0 %v33
  %630 = vmatmul.f32.gmra.mxu0 %v612
  %v631 = vpop.f32.mrf.mxu0
  %v632 = vadd.f32 0.0, %v631
  %633 = vdwg.mxu0
  %v635 = vsel %vm46, %v632, 0
  %637 = vmatpush.msra.mxu0 0.0
  %638 = vmatpush.msra.mxu0 0.0
  %639 = vmatpush.msra.mxu0 0.0
  %640 = vmatpush.msra.mxu0 0.0
  %641 = vmatpush.msra.mxu0 0.0
  %642 = vmatpush.msra.mxu0 0.0
  %643 = vmatpush.msra.mxu0 0.0
  %644 = vmatpush.msra.mxu0 0.0
  %645 = vmatpush.msra.mxu0 0.0
  %646 = vmatpush.msra.mxu0 0.0
  %647 = vmatpush.msra.mxu0 0.0
  %648 = vmatpush.msra.mxu0 0.0
  %649 = vmatpush.msra.mxu0 0.0
  %650 = vmatpush.msra.mxu0 0.0
  %651 = vmatpush.msra.mxu0 0.0
  %652 = vmatpush.msra.mxu0 %v244
  %653 = vmatmul.f32.gmra.mxu0 %v635
  %v654 = vpop.f32.mrf.mxu0
  %v655 = vadd.f32 0.0, %v654
  %656 = vdwg.mxu0
  %v658 = vrot.slane %v655, 1
  %v659 = vperm.slane %v655, 0
  %v660 = vperm.slane %v658, 0
  %v663 = vsub.f32 %v587, %v659
  %v664 = vsub.f32 %v588, %v659
  %v665 = vsub.f32 %v589, %v660
  %v666 = vsub.f32 %v590, %v660
  %v667 = vmul.f32 %v663, %v663
  %v668 = vmul.f32 %v664, %v664
  %v669 = vmul.f32 %v665, %v665
  %v670 = vmul.f32 %v666, %v666
  %v671 = vsel %vm195, %v667, 0.0
  %v672 = vsel %vm195, %v668, 0.0
  %v673 = vadd.f32 %v671, %v672
  %v674 = vrot.slane %v673, 4
  %v675 = vadd.f32 %v673, %v674
  %v676 = vrot.slane %v675, 2
  %v677 = vadd.f32 %v675, %v676
  %v678 = vrot.slane %v677, 1
  %v679 = vadd.f32 %v677, %v678
  %v680 = vsel %vm195, %v669, 0.0
  %v681 = vsel %vm195, %v670, 0.0
  %v682 = vadd.f32 %v680, %v681
  %v683 = vrot.slane %v682, 4
  %v684 = vadd.f32 %v682, %v683
  %v685 = vrot.slane %v684, 2
  %v686 = vadd.f32 %v684, %v685
  %v687 = vrot.slane %v686, 1
  %v688 = vadd.f32 %v686, %v687
  %v691 = vsel %vm216, %v688, %v679
  %v692 = vsel %vm195, %v691, 0
  %694 = vmatpush.msra.mxu0 0.0
  %695 = vmatpush.msra.mxu0 0.0
  %696 = vmatpush.msra.mxu0 0.0
  %697 = vmatpush.msra.mxu0 0.0
  %698 = vmatpush.msra.mxu0 0.0
  %699 = vmatpush.msra.mxu0 0.0
  %700 = vmatpush.msra.mxu0 0.0
  %701 = vmatpush.msra.mxu0 0.0
  %702 = vmatpush.msra.mxu0 0.0
  %703 = vmatpush.msra.mxu0 0.0
  %704 = vmatpush.msra.mxu0 0.0
  %705 = vmatpush.msra.mxu0 0.0
  %706 = vmatpush.msra.mxu0 0.0
  %707 = vmatpush.msra.mxu0 0.0
  %708 = vmatpush.msra.mxu0 0.0
  %709 = vmatpush.msra.mxu0 %v33
  %710 = vmatmul.f32.gmra.mxu0 %v692
  %v711 = vpop.f32.mrf.mxu0
  %v712 = vadd.f32 0.0, %v711
  %713 = vdwg.mxu0
  %v715 = vsel %vm46, %v712, 0
  %717 = vmatpush.msra.mxu0 0.0
  %718 = vmatpush.msra.mxu0 0.0
  %719 = vmatpush.msra.mxu0 0.0
  %720 = vmatpush.msra.mxu0 0.0
  %721 = vmatpush.msra.mxu0 0.0
  %722 = vmatpush.msra.mxu0 0.0
  %723 = vmatpush.msra.mxu0 0.0
  %724 = vmatpush.msra.mxu0 0.0
  %725 = vmatpush.msra.mxu0 0.0
  %726 = vmatpush.msra.mxu0 0.0
  %727 = vmatpush.msra.mxu0 0.0
  %728 = vmatpush.msra.mxu0 0.0
  %729 = vmatpush.msra.mxu0 0.0
  %730 = vmatpush.msra.mxu0 0.0
  %731 = vmatpush.msra.mxu0 0.0
  %732 = vmatpush.msra.mxu0 %v244
  %733 = vmatmul.f32.gmra.mxu0 %v715
  %v734 = vpop.f32.mrf.mxu0
  %v735 = vadd.f32 1e-05, %v734
  %736 = vdwg.mxu0
  %v737 = vrsqrt.pop %v735
  %v738 = vmul.f32 %v737, %v735
  %v739 = vmul.f32 %v738, %v737
  %v740 = vmul.f32 0.5, %v739
  %v741 = vsub.f32 1.5, %v740
  %v742 = vmul.f32 %v737, %v741
  %vm743 = vweird.f32 %v735
  %vm744 = vweird.f32 %v737
  %vm745 = vmor %vm743, %vm744
  %v746 = vsel %vm745, %v737, %v742
  %v747 = vperm.slane %v32, 4
  %v748 = vmul.f32 %v747, %v746
  %v750 = vrot.slane %v748, 1
  %v751 = vperm.slane %v748, 0
  %v752 = vperm.slane %v750, 0
  %v755 = vmul.f32 %v663, %v751
  %v756 = vmul.f32 %v664, %v751
  %v757 = vmul.f32 %v665, %v752
  %v758 = vmul.f32 %v666, %v752
  %v759 = vperm.slane %v32, 5
  %v760 = vadd.f32 %v755, %v759
  %v761 = vadd.f32 %v756, %v759
  %v762 = vadd.f32 %v757, %v759
  %v763 = vadd.f32 %v758, %v759
  %v764 = vmin.f32 %v760, 20.0
  %v765 = vmin.f32 %v761, 20.0
  %v766 = vmin.f32 %v762, 20.0
  %v767 = vmin.f32 %v763, 20.0
  %v768 = vmul.f32 %v764, 1.442695
  %v769 = vpow.pop %v768
  %v770 = vmul.f32 %v765, 1.442695
  %v771 = vpow.pop %v770
  %v772 = vmul.f32 %v766, 1.442695
  %v773 = vpow.pop %v772
  %v774 = vmul.f32 %v767, 1.442695
  %v775 = vpow.pop %v774
  %v776 = vadd.f32 %v769, 2.0
  %v777 = vadd.f32 %v771, 2.0
  %v778 = vadd.f32 %v773, 2.0
  %v779 = vadd.f32 %v775, 2.0
  %v780 = vmul.f32 %v769, %v776
  %v781 = vmul.f32 %v771, %v777
  %v782 = vmul.f32 %v773, %v778
  %v783 = vmul.f32 %v775, %v779
  %v784 = vmul.f32 %v760, %v780
  %v785 = vmul.f32 %v761, %v781
  %v786 = vmul.f32 %v762, %v782
  %v787 = vmul.f32 %v763, %v783
  %v788 = vadd.f32 %v780, 2.0
  %v789 = vadd.f32 %v781, 2.0
  %v790 = vadd.f32 %v782, 2.0
  %v791 = vadd.f32 %v783, 2.0
  %v792 = vrcp.pop %v788
  %v793 = vrcp.pop %v789
  %v794 = vrcp.pop %v790
  %v795 = vrcp.pop %v791
  %v796 = vmul.f32 %v784, %v792
  %v797 = vmul.f32 %v785, %v793
  %v798 = vmul.f32 %v786, %v794
  %v799 = vmul.f32 %v787, %v795
  %v800 = vld [vmem:[%s0 + $0x1] sm:$0xff]
  %v801 = vld [vmem:[%s0 + $0x9] sm:$0xff]
  %v802 = vld [vmem:[%s0 + $0x19] sm:$0xff]
  %v803 = vld [vmem:[%s0 + $0x21] sm:$0xff]
  %v804 = vld [vmem:[%s5] sm:$0xf]
  %v806 = vsel %vm46, %v800, 0
  %v809 = vsel %vm46, %v801, 0
  %v812 = vsel %vm46, %v802, 0
  %v815 = vsel %vm46, %v803, 0
  %v818 = vsel %vm59, %v804, 0
  %820 = vmatpush.msra.mxu0 0.0
  %821 = vmatpush.msra.mxu0 0.0
  %822 = vmatpush.msra.mxu0 0.0
  %823 = vmatpush.msra.mxu0 0.0
  %824 = vmatpush.msra.mxu0 0.0
  %825 = vmatpush.msra.mxu0 0.0
  %826 = vmatpush.msra.mxu0 0.0
  %827 = vmatpush.msra.mxu0 0.0
  %828 = vmatpush.msra.mxu0 0.0
  %829 = vmatpush.msra.mxu0 0.0
  %830 = vmatpush.msra.mxu0 0.0
  %831 = vmatpush.msra.mxu0 0.0
  %832 = vmatpush.msra.mxu0 0.0
  %833 = vmatpush.msra.mxu0 0.0
  %834 = vmatpush.msra.mxu0 0.0
  %835 = vmatpush.msra.mxu0 %v818
  %836 = vmatmul.f32.gmra.mxu0 %v806
  %v837 = vpop.f32.mrf.mxu0
  %v838 = vadd.f32 0.0, %v837
  %839 = vmatmul.f32.gmra.mxu0 %v809
  %v840 = vpop.f32.mrf.mxu0
  %v841 = vadd.f32 0.0, %v840
  %842 = vmatmul.f32.gmra.mxu0 %v812
  %v843 = vpop.f32.mrf.mxu0
  %v844 = vadd.f32 0.0, %v843
  %845 = vmatmul.f32.gmra.mxu0 %v815
  %v846 = vpop.f32.mrf.mxu0
  %v847 = vadd.f32 0.0, %v846
  %848 = vdwg.mxu0
  %v849 = vadd.f32 %v796, %v838
  %v850 = vadd.f32 %v797, %v841
  %v851 = vadd.f32 %v798, %v844
  %v852 = vadd.f32 %v799, %v847
  %v853 = vperm.slane %v32, 6
  %v854 = vadd.f32 %v849, %v853
  %v855 = vadd.f32 %v850, %v853
  %v856 = vadd.f32 %v851, %v853
  %v857 = vadd.f32 %v852, %v853
  %858 = vst.msk [vmem:[%s9] sm:$0xff] %vm195, %v854
  %859 = vst.msk [vmem:[%s9 + $0x8] sm:$0xff] %vm195, %v855
  %860 = vst.msk [vmem:[%s9 + $0x10] sm:$0xff] %vm195, %v856
  %861 = vst.msk [vmem:[%s9 + $0x18] sm:$0xff] %vm195, %v857
  // Predicated region
  $region38: #{tpu_custom_call.1} parent=0 // pred_check
    _
  $region39: #{tpu_custom_call.1} parent=0 // pred_check_branch
    %863 = sbr.rel (0) target = $region41
  $region40: #{tpu_custom_call.1} parent=0 // pred_region
    _
  $region41: #{tpu_custom_call.1} parent=0 // pred_fallthru
    _
  // Predicated region
  $region42: #{tpu_custom_call.1} parent=0 // pred_check
    _
  $region43: #{tpu_custom_call.1} parent=0 // pred_check_branch
    %865 = sbr.rel (0) target = $region45
  $region44: #{tpu_custom_call.1} parent=0 // pred_region
    _
  $region45: #{tpu_custom_call.1} parent=0 // pred_fallthru
    _

</llo_original>
